<compile_context>
chip_gen: v7x
topology: tpu7x:2x2x1
jax: 0.10.0
libtpu: 0.0.40
codegen_flags: <defaults>
</compile_context>

<pallas_src>
import functools

import numpy as np
import jax
import jax.numpy as jnp
from jax.experimental import pallas as pl
from jax.experimental.pallas import tpu as pltpu  # noqa: F401  (kept for parity / future tuning)


# --------------------------- parameter construction (host, numpy) ---------------------------

def generate_w_matrix_diff(n_neurons, n_bumps, length, w_shift, w_scaling, w_weight):
    length2 = int(2 * np.ceil(length))
    positions = np.arange(-length2, length2 + 1)
    strength = (w_weight * n_bumps / n_neurons) if w_scaling else w_weight
    values = strength * (np.cos(np.pi * positions / length) - 1.0) / 2.0
    values = values * (np.abs(positions) < 2 * length)
    w_unshifted = np.zeros(n_neurons, dtype=np.float64)
    for p, w in zip(positions, values):
        w_unshifted[p % n_neurons] += w
    w_quadrant = np.vstack([np.roll(w_unshifted, i) for i in range(n_neurons)])
    w_matrix = np.hstack((np.roll(w_quadrant, -w_shift, 0), np.roll(w_quadrant, w_shift, 0)))
    w_matrix = np.vstack((w_matrix, w_matrix))
    return w_matrix


def generate_alpha_matrix_diff(neurons, length, alpha, w_shift, w_scaling, w_weight):
    cutoff = int((1 - alpha) * length)
    w_matrix = generate_w_matrix_diff(neurons + cutoff, 1, length, w_shift, w_scaling, w_weight)
    real_w = np.zeros((neurons * 2, neurons * 2), dtype=np.float64)
    end = 2 * neurons + cutoff
    real_w[:neurons, :neurons] = w_matrix[:neurons, :neurons]
    real_w[neurons:, neurons:] = w_matrix[neurons + cutoff:end, neurons + cutoff:end]
    real_w[:neurons, neurons:] = w_matrix[:neurons, neurons + cutoff:end]
    real_w[neurons:, :neurons] = w_matrix[neurons + cutoff:end, :neurons]
    return real_w.astype(np.float32)


def init_hidden_np(W, w_iv, gamma, bias, h0, drive, *, alpha, n_neurons,
                   pulse_position, t_setup, max_settle=10_000):
    """Host-side replica of RingModule.init_hidden (deterministic, input-independent).

    Computed once at parameter-setup time in float32 numpy; removes ~1000 strictly
    serial matvecs (and a data-dependent while-loop) from the device critical path.
    """
    # TODO(synk): PyTorch builds init_drive as float64 (which would dtype-mismatch the
    # float32 Linear); we run the whole init in float32 with the same 0.1 drive value.
    vel = float(np.dot(drive.astype(np.float32), w_iv.astype(np.float32)))
    i2h = vel * gamma + bias                                    # (H,)

    def recurrence(h):
        return (1.0 - alpha) * h + alpha * np.maximum(i2h + h @ W, 0.0)

    h = h0.astype(np.float32).copy()
    for _ in range(t_setup):                                    # warm-up
        h = recurrence(h)
    it = 0
    # Settle until the bump in the first ring sits at pulse_position; iteration cap
    # avoids an infinite loop if the bump never lands exactly on pulse_position.
    while int(np.argmax(h[:n_neurons])) != pulse_position and it < max_settle:
        h = recurrence(h)
        it += 1
    return h.astype(np.float32)


# ------------------------------- fused forward kernel --------------------------------

def fused_rnn_kernel(x_ref, win_ref, bias_ref, wrec_ref, hinit_ref, wout_ref, bout_ref,
                     acts_ref, out_ref, *, alpha, batch, seq_len):
    """Single-invocation kernel: all modules + time loop + output Linear fused.

    x_ref     : (T*B, I)        flattened time-major inputs
    win_ref   : (I, F)          alpha * (input_to_vel ⊗ vel_to_ring.weight), block per module
    bias_ref  : (1, F)          alpha * vel_to_ring.bias, tiled per module
    wrec_ref  : (F, F)          alpha * block-diag(wAttractor) over modules
    hinit_ref : (1, F)          pre-settled hidden state, tiled per module
    wout_ref  : (F, O_pad)      output Linear weight^T, lane-padded to 128
    bout_ref  : (1, O_pad)      output Linear bias, lane-padded
    acts_ref  : (T*B, F)        concatenated module activities (torch.cat(..., dim=-1))
    out_ref   : (T*B, O_pad)    output Linear result (sliced back to O in the wrapper)
    """
    F = wrec_ref.shape[0]

    # i2h for every timestep up front: one (T*B, I) x (I, F) MXU pass. alpha is already
    # folded into win/bias (relu(alpha*x) = alpha*relu(x), alpha > 0), so the serial
    # recurrence below has no dependent scale multiply.
    i2h_all = (jnp.dot(x_ref[...], win_ref[...], preferred_element_type=jnp.float32)
               + bias_ref[...])                                            # (T*B, F)

    W = wrec_ref[...]                                                      # (F, F)
    h = jnp.broadcast_to(hinit_ref[...], (batch, F))
    one_m_alpha = jnp.float32(1.0 - alpha)

    # T is small and static: fully unrolled; per-step activities are buffered and
    # written with one dense full-tile store instead of T masked partial stores.
    acts = []
    for t in range(seq_len):
        h2h = jnp.dot(h, W, preferred_element_type=jnp.float32)
        h = one_m_alpha * h + jnp.maximum(i2h_all[t * batch:(t + 1) * batch, :] + h2h, 0.0)
        acts.append(h)
    acts_all = jnp.concatenate(acts, axis=0)                               # (T*B, F)
    acts_ref[...] = acts_all

    # Fused output Linear (lane axis padded to 128 -> unmasked vst).
    out_ref[...] = (jnp.dot(acts_all, wout_ref[...], preferred_element_type=jnp.float32)
                    + bout_ref[...])


def multi_mod_rnn_forward(x2d, w_in_a, bias_a, w_rec_a, h_init_full, wt_pad, b_pad,
                          *, alpha, batch, seq_len, out_size):
    TB, _ = x2d.shape
    F = w_rec_a.shape[0]
    O_pad = wt_pad.shape[1]
    kernel = functools.partial(fused_rnn_kernel, alpha=alpha, batch=batch, seq_len=seq_len)
    acts, out = pl.pallas_call(
        kernel,
        out_shape=(jax.ShapeDtypeStruct((TB, F), jnp.float32),
                   jax.ShapeDtypeStruct((TB, O_pad), jnp.float32)),
    )(x2d, w_in_a, bias_a, w_rec_a, h_init_full, wt_pad, b_pad)
    return acts, out[:, :out_size]


# ------------------------------------------ main -------------------------------------

if __name__ == "__main__":
    # Small hyperparameters consistent with the module.
    input_size = 4
    output_size = 8
    n_modules = 2
    n_neurons = 64            # hidden_size = 128 per module
    n_bumps = 1
    length = 20
    dt, tau = 0.5, 10.0
    w_weight = 8.0
    w_shift = 0               # zero shift => bump stays put; settle loop terminates deterministically
    w_scaling = True
    gamma_multiplier = 1.0
    pulse_mag = 1.0
    pulse_position = 10
    t_setup = 1000
    T, B = 8, 2

    H = 2 * n_neurons
    F = n_modules * H
    alpha = float(dt / tau)

    # Per-module deterministic parameters (every RingModule is initialised identically
    # in the PyTorch __init__; only the output Linear is random).
    W = generate_alpha_matrix_diff(n_neurons, length, 1.0, w_shift, w_scaling, w_weight)   # (H, H)
    gamma = (gamma_multiplier *
             np.concatenate((-np.ones(n_neurons), np.ones(n_neurons)))).astype(np.float32)  # (H,)
    vel_bias = np.ones(H, np.float32)
    w_iv = np.ones(input_size, np.float32)          # nn.init.ones_(input_to_vel.weight)

    bump_period = int(n_neurons / n_bumps)
    pulse_inds = bump_period * np.arange(n_bumps)
    pulse_inds = np.concatenate((pulse_inds, n_neurons + pulse_inds))
    pulse_inds = pulse_inds + int(pulse_position % bump_period)
    pulse_inputs = np.zeros(H, np.float32)
    pulse_inputs[pulse_inds] = pulse_mag
    h0 = 0.005 * np.ones(H, np.float32) + pulse_inputs
    init_drive = np.full(input_size, 0.1, np.float32)

    # init_hidden on the HOST, once (all modules are initialised identically; if
    # per-module params ever diverge, run it once per module here).
    h_init = init_hidden_np(W, w_iv, gamma, vel_bias, h0, init_drive,
                            alpha=alpha, n_neurons=n_neurons,
                            pulse_position=pulse_position, t_setup=t_setup)   # (H,)

    # --- one-time fused-parameter construction (alpha folded in, modules block-fused) ---
    w_rec_a = np.zeros((F, F), np.float32)          # block-diag alpha*W over modules
    w_in_a = np.zeros((input_size, F), np.float32)  # alpha * (w_iv outer gamma) per module
    bias_a = np.zeros((1, F), np.float32)
    h_init_full = np.zeros((1, F), np.float32)
    for m in range(n_modules):
        sl = slice(m * H, (m + 1) * H)
        w_rec_a[sl, sl] = alpha * W
        w_in_a[:, sl] = alpha * np.outer(w_iv, gamma)
        bias_a[0, sl] = alpha * vel_bias
        h_init_full[0, sl] = h_init

    # Output Linear parameters (deterministic PRNG) — pad/transpose hoisted to setup.
    key = jax.random.PRNGKey(0)
    k_x, k_w, k_b = jax.random.split(key, 3)
    bound = 1.0 / np.sqrt(F)
    w_out = jax.random.uniform(k_w, (output_size, F), jnp.float32, -bound, bound)
    b_out = jax.random.uniform(k_b, (output_size,), jnp.float32, -bound, bound)
    O_pad = ((output_size + 127) // 128) * 128
    wt_pad = np.zeros((F, O_pad), np.float32)
    wt_pad[:, :output_size] = np.asarray(w_out).T
    bp_pad = np.zeros((1, O_pad), np.float32)
    bp_pad[0, :output_size] = np.asarray(b_out)

    # Input sequence (T, B, I), flattened time-major to (T*B, I).
    x = jax.random.normal(k_x, (T, B, input_size), dtype=jnp.float32)
    x2d = x.reshape(T * B, input_size)

    # Single fused Pallas kernel: all modules + time recurrence + output Linear.
    acts, out2d = multi_mod_rnn_forward(
        x2d,
        jnp.asarray(w_in_a), jnp.asarray(bias_a), jnp.asarray(w_rec_a),
        jnp.asarray(h_init_full), jnp.asarray(wt_pad), jnp.asarray(bp_pad),
        alpha=alpha, batch=B, seq_len=T, out_size=output_size)

    # acts rows are time-major, batch-minor -> (T, B, M*H) == torch.cat(activities, dim=-1)
    activity = acts.reshape(T, B, F)
    out = out2d.reshape(T, B, output_size)

    out, activity = jax.block_until_ready((out, activity))
    assert np.isfinite(np.asarray(out)).all() and np.isfinite(np.asarray(activity)).all()
    print("KERNEL_OK")
</pallas_src>

<mosaic_0001>
module attributes {stable_mosaic.version = 11 : i64} {
  func.func @fused_rnn_kernel(%arg0: memref<16x4xf32, #tpu.memory_space<vmem>>, %arg1: memref<4x256xf32, #tpu.memory_space<vmem>>, %arg2: memref<1x256xf32, #tpu.memory_space<vmem>>, %arg3: memref<256x256xf32, #tpu.memory_space<vmem>>, %arg4: memref<1x256xf32, #tpu.memory_space<vmem>>, %arg5: memref<256x128xf32, #tpu.memory_space<vmem>>, %arg6: memref<1x128xf32, #tpu.memory_space<vmem>>, %arg7: memref<16x256xf32, #tpu.memory_space<vmem>>, %arg8: memref<16x128xf32, #tpu.memory_space<vmem>>) attributes {dimension_semantics = [], scalar_prefetch = 0 : i64, scratch_operands = 0 : i64, tpu.core_type = #tpu.core_type<tc>} {
    %c0 = arith.constant 0 : index
    %c0_0 = arith.constant 0 : index
    %0 = vector.load %arg0[%c0, %c0_0] : memref<16x4xf32, #tpu.memory_space<vmem>>, vector<16x4xf32>
    %c0_1 = arith.constant 0 : index
    %c0_2 = arith.constant 0 : index
    %1 = vector.load %arg1[%c0_1, %c0_2] : memref<4x256xf32, #tpu.memory_space<vmem>>, vector<4x256xf32>
    %cst = arith.constant dense<0.000000e+00> : vector<16x256xf32>
    %2 = tpu.matmul %0, %1, %cst {dimension_numbers = #tpu.dot_dimension_numbers<[1], [0], [0], [1], [0, 0, 1, 1], [], []>} : vector<16x4xf32>, vector<4x256xf32>, vector<16x256xf32> -> vector<16x256xf32>
    %c0_3 = arith.constant 0 : index
    %c0_4 = arith.constant 0 : index
    %3 = vector.load %arg2[%c0_3, %c0_4] : memref<1x256xf32, #tpu.memory_space<vmem>>, vector<1x256xf32>
    %4 = vector.broadcast %3 : vector<1x256xf32> to vector<16x256xf32>
    %5 = arith.addf %2, %4 : vector<16x256xf32>
    %c0_5 = arith.constant 0 : index
    %c0_6 = arith.constant 0 : index
    %6 = vector.load %arg3[%c0_5, %c0_6] : memref<256x256xf32, #tpu.memory_space<vmem>>, vector<256x256xf32>
    %c0_7 = arith.constant 0 : index
    %c0_8 = arith.constant 0 : index
    %7 = vector.load %arg4[%c0_7, %c0_8] : memref<1x256xf32, #tpu.memory_space<vmem>>, vector<1x256xf32>
    %8 = vector.shape_cast %7 : vector<1x256xf32> to vector<1x256xf32>
    %9 = vector.broadcast %8 : vector<1x256xf32> to vector<2x256xf32>
    %cst_9 = arith.constant dense<0.000000e+00> : vector<2x256xf32>
    %10 = tpu.matmul %9, %6, %cst_9 {dimension_numbers = #tpu.dot_dimension_numbers<[1], [0], [0], [1], [0, 0, 1, 1], [], []>} : vector<2x256xf32>, vector<256x256xf32>, vector<2x256xf32> -> vector<2x256xf32>
    %cst_10 = arith.constant 0.949999988 : f32
    %11 = vector.broadcast %cst_10 : f32 to vector<2x256xf32>
    %12 = arith.mulf %11, %9 : vector<2x256xf32>
    %13 = vector.extract_strided_slice %5 {offsets = [0, 0], sizes = [2, 256], strides = [1, 1]} : vector<16x256xf32> to vector<2x256xf32>
    %14 = arith.addf %13, %10 : vector<2x256xf32>
    %cst_11 = arith.constant 0.000000e+00 : f32
    %15 = vector.broadcast %cst_11 : f32 to vector<2x256xf32>
    %16 = arith.maximumf %14, %15 : vector<2x256xf32>
    %17 = arith.addf %12, %16 : vector<2x256xf32>
    %cst_12 = arith.constant dense<0.000000e+00> : vector<2x256xf32>
    %18 = tpu.matmul %17, %6, %cst_12 {dimension_numbers = #tpu.dot_dimension_numbers<[1], [0], [0], [1], [0, 0, 1, 1], [], []>} : vector<2x256xf32>, vector<256x256xf32>, vector<2x256xf32> -> vector<2x256xf32>
    %cst_13 = arith.constant 0.949999988 : f32
    %19 = vector.broadcast %cst_13 : f32 to vector<2x256xf32>
    %20 = arith.mulf %19, %17 : vector<2x256xf32>
    %21 = vector.extract_strided_slice %5 {offsets = [2, 0], sizes = [2, 256], strides = [1, 1]} : vector<16x256xf32> to vector<2x256xf32>
    %22 = arith.addf %21, %18 : vector<2x256xf32>
    %cst_14 = arith.constant 0.000000e+00 : f32
    %23 = vector.broadcast %cst_14 : f32 to vector<2x256xf32>
    %24 = arith.maximumf %22, %23 : vector<2x256xf32>
    %25 = arith.addf %20, %24 : vector<2x256xf32>
    %cst_15 = arith.constant dense<0.000000e+00> : vector<2x256xf32>
    %26 = tpu.matmul %25, %6, %cst_15 {dimension_numbers = #tpu.dot_dimension_numbers<[1], [0], [0], [1], [0, 0, 1, 1], [], []>} : vector<2x256xf32>, vector<256x256xf32>, vector<2x256xf32> -> vector<2x256xf32>
    %cst_16 = arith.constant 0.949999988 : f32
    %27 = vector.broadcast %cst_16 : f32 to vector<2x256xf32>
    %28 = arith.mulf %27, %25 : vector<2x256xf32>
    %29 = vector.extract_strided_slice %5 {offsets = [4, 0], sizes = [2, 256], strides = [1, 1]} : vector<16x256xf32> to vector<2x256xf32>
    %30 = arith.addf %29, %26 : vector<2x256xf32>
    %cst_17 = arith.constant 0.000000e+00 : f32
    %31 = vector.broadcast %cst_17 : f32 to vector<2x256xf32>
    %32 = arith.maximumf %30, %31 : vector<2x256xf32>
    %33 = arith.addf %28, %32 : vector<2x256xf32>
    %cst_18 = arith.constant dense<0.000000e+00> : vector<2x256xf32>
    %34 = tpu.matmul %33, %6, %cst_18 {dimension_numbers = #tpu.dot_dimension_numbers<[1], [0], [0], [1], [0, 0, 1, 1], [], []>} : vector<2x256xf32>, vector<256x256xf32>, vector<2x256xf32> -> vector<2x256xf32>
    %cst_19 = arith.constant 0.949999988 : f32
    %35 = vector.broadcast %cst_19 : f32 to vector<2x256xf32>
    %36 = arith.mulf %35, %33 : vector<2x256xf32>
    %37 = vector.extract_strided_slice %5 {offsets = [6, 0], sizes = [2, 256], strides = [1, 1]} : vector<16x256xf32> to vector<2x256xf32>
    %38 = arith.addf %37, %34 : vector<2x256xf32>
    %cst_20 = arith.constant 0.000000e+00 : f32
    %39 = vector.broadcast %cst_20 : f32 to vector<2x256xf32>
    %40 = arith.maximumf %38, %39 : vector<2x256xf32>
    %41 = arith.addf %36, %40 : vector<2x256xf32>
    %cst_21 = arith.constant dense<0.000000e+00> : vector<2x256xf32>
    %42 = tpu.matmul %41, %6, %cst_21 {dimension_numbers = #tpu.dot_dimension_numbers<[1], [0], [0], [1], [0, 0, 1, 1], [], []>} : vector<2x256xf32>, vector<256x256xf32>, vector<2x256xf32> -> vector<2x256xf32>
    %cst_22 = arith.constant 0.949999988 : f32
    %43 = vector.broadcast %cst_22 : f32 to vector<2x256xf32>
    %44 = arith.mulf %43, %41 : vector<2x256xf32>
    %45 = vector.extract_strided_slice %5 {offsets = [8, 0], sizes = [2, 256], strides = [1, 1]} : vector<16x256xf32> to vector<2x256xf32>
    %46 = arith.addf %45, %42 : vector<2x256xf32>
    %cst_23 = arith.constant 0.000000e+00 : f32
    %47 = vector.broadcast %cst_23 : f32 to vector<2x256xf32>
    %48 = arith.maximumf %46, %47 : vector<2x256xf32>
    %49 = arith.addf %44, %48 : vector<2x256xf32>
    %cst_24 = arith.constant dense<0.000000e+00> : vector<2x256xf32>
    %50 = tpu.matmul %49, %6, %cst_24 {dimension_numbers = #tpu.dot_dimension_numbers<[1], [0], [0], [1], [0, 0, 1, 1], [], []>} : vector<2x256xf32>, vector<256x256xf32>, vector<2x256xf32> -> vector<2x256xf32>
    %cst_25 = arith.constant 0.949999988 : f32
    %51 = vector.broadcast %cst_25 : f32 to vector<2x256xf32>
    %52 = arith.mulf %51, %49 : vector<2x256xf32>
    %53 = vector.extract_strided_slice %5 {offsets = [10, 0], sizes = [2, 256], strides = [1, 1]} : vector<16x256xf32> to vector<2x256xf32>
    %54 = arith.addf %53, %50 : vector<2x256xf32>
    %cst_26 = arith.constant 0.000000e+00 : f32
    %55 = vector.broadcast %cst_26 : f32 to vector<2x256xf32>
    %56 = arith.maximumf %54, %55 : vector<2x256xf32>
    %57 = arith.addf %52, %56 : vector<2x256xf32>
    %cst_27 = arith.constant dense<0.000000e+00> : vector<2x256xf32>
    %58 = tpu.matmul %57, %6, %cst_27 {dimension_numbers = #tpu.dot_dimension_numbers<[1], [0], [0], [1], [0, 0, 1, 1], [], []>} : vector<2x256xf32>, vector<256x256xf32>, vector<2x256xf32> -> vector<2x256xf32>
    %cst_28 = arith.constant 0.949999988 : f32
    %59 = vector.broadcast %cst_28 : f32 to vector<2x256xf32>
    %60 = arith.mulf %59, %57 : vector<2x256xf32>
    %61 = vector.extract_strided_slice %5 {offsets = [12, 0], sizes = [2, 256], strides = [1, 1]} : vector<16x256xf32> to vector<2x256xf32>
    %62 = arith.addf %61, %58 : vector<2x256xf32>
    %cst_29 = arith.constant 0.000000e+00 : f32
    %63 = vector.broadcast %cst_29 : f32 to vector<2x256xf32>
    %64 = arith.maximumf %62, %63 : vector<2x256xf32>
    %65 = arith.addf %60, %64 : vector<2x256xf32>
    %cst_30 = arith.constant dense<0.000000e+00> : vector<2x256xf32>
    %66 = tpu.matmul %65, %6, %cst_30 {dimension_numbers = #tpu.dot_dimension_numbers<[1], [0], [0], [1], [0, 0, 1, 1], [], []>} : vector<2x256xf32>, vector<256x256xf32>, vector<2x256xf32> -> vector<2x256xf32>
    %cst_31 = arith.constant 0.949999988 : f32
    %67 = vector.broadcast %cst_31 : f32 to vector<2x256xf32>
    %68 = arith.mulf %67, %65 : vector<2x256xf32>
    %69 = vector.extract_strided_slice %5 {offsets = [14, 0], sizes = [2, 256], strides = [1, 1]} : vector<16x256xf32> to vector<2x256xf32>
    %70 = arith.addf %69, %66 : vector<2x256xf32>
    %cst_32 = arith.constant 0.000000e+00 : f32
    %71 = vector.broadcast %cst_32 : f32 to vector<2x256xf32>
    %72 = arith.maximumf %70, %71 : vector<2x256xf32>
    %73 = arith.addf %68, %72 : vector<2x256xf32>
    %74 = tpu.concatenate %17, %25, %33, %41, %49, %57, %65, %73 in 0 : vector<2x256xf32>, vector<2x256xf32>, vector<2x256xf32>, vector<2x256xf32>, vector<2x256xf32>, vector<2x256xf32>, vector<2x256xf32>, vector<2x256xf32> -> vector<16x256xf32>
    %c0_33 = arith.constant 0 : index
    %c0_34 = arith.constant 0 : index
    %75 = vector.load %arg7[%c0_33, %c0_34] : memref<16x256xf32, #tpu.memory_space<vmem>>, vector<16x256xf32>
    tpu.vector_store %arg7[%c0_33, %c0_34], %74 {strides = array<i32>} : memref<16x256xf32, #tpu.memory_space<vmem>>, vector<16x256xf32>,
    %c0_35 = arith.constant 0 : index
    %c0_36 = arith.constant 0 : index
    %76 = vector.load %arg5[%c0_35, %c0_36] : memref<256x128xf32, #tpu.memory_space<vmem>>, vector<256x128xf32>
    %cst_37 = arith.constant dense<0.000000e+00> : vector<16x128xf32>
    %77 = tpu.matmul %74, %76, %cst_37 {dimension_numbers = #tpu.dot_dimension_numbers<[1], [0], [0], [1], [0, 0, 1, 1], [], []>} : vector<16x256xf32>, vector<256x128xf32>, vector<16x128xf32> -> vector<16x128xf32>
    %c0_38 = arith.constant 0 : index
    %c0_39 = arith.constant 0 : index
    %78 = vector.load %arg6[%c0_38, %c0_39] : memref<1x128xf32, #tpu.memory_space<vmem>>, vector<1x128xf32>
    %79 = vector.broadcast %78 : vector<1x128xf32> to vector<16x128xf32>
    %80 = arith.addf %77, %79 : vector<16x128xf32>
    %c0_40 = arith.constant 0 : index
    %c0_41 = arith.constant 0 : index
    %81 = vector.load %arg8[%c0_40, %c0_41] : memref<16x128xf32, #tpu.memory_space<vmem>>, vector<16x128xf32>
    tpu.vector_store %arg8[%c0_40, %c0_41], %80 {strides = array<i32>} : memref<16x128xf32, #tpu.memory_space<vmem>>, vector<16x128xf32>,
    return
  }
}

</mosaic_0001>

<llo_original>
// kernel: tpu_custom_call.1
$region0: #{tpu_custom_call.1}
  #allocation0 [shape = 'u32[]', space=smem, size = 0x4, offset = 0x4, fixed_abs, tag = 'smem constant byte address 0x4 - core index']
  #allocation1 [shape = 'u32[144,128]{1,0:T(1,128)}', space=vmem, size = 0x12000, scoped, tag = 'internal scratch']
  %s0 = inlined_call_operand.vmem [shape: f32[16,4], index: 0, kind: input, shape index: {}]
  %s1 = inlined_call_operand.vmem [shape: f32[4,256], index: 1, kind: input, shape index: {}]
  %s2 = inlined_call_operand.vmem [shape: f32[1,256], index: 2, kind: input, shape index: {}]
  %s3 = inlined_call_operand.hbm [shape: f32[256,256], index: 3, kind: input, shape index: {}]
  %s4 = inlined_call_operand.vmem [shape: f32[1,256], index: 4, kind: input, shape index: {}]
  %s5 = inlined_call_operand.hbm [shape: f32[256,128], index: 5, kind: input, shape index: {}]
  %s6 = inlined_call_operand.vmem [shape: f32[1,128], index: 6, kind: input, shape index: {}]
  %s7 = inlined_call_operand.hbm [shape: f32[16,256], index: 7, kind: output, shape index: {0}]
  %s8 = inlined_call_operand.hbm [shape: f32[16,128], index: 8, kind: output, shape index: {1}]
  %9 = xla_tuple %s7, %s8
  %s10 = sld [smem:[#allocation0]]
  $region54: #{tpu_custom_call.1} parent=0
    _
  %s12 = ssub.s32 1, %s10
  %s13 = scalar_select 0, %s12, %s10
  $region1: #{tpu_custom_call.1} parent=0
    #allocation2 [shape = 'u8[262144]{0}', space=vmem, size = 0x40000, scoped, tag = 'input window, operand 3, single buffered']
    #allocation3 [shape = 's32[1]{0}', space=sflag, size = 0x4, scoped, tag = 'scoped memory for tpu_custom_call.1']
    #allocation4 [shape = 's32[1]{0}', space=sflag, size = 0x4, scoped, tag = 'scoped memory for tpu_custom_call.1']
    #allocation5 [shape = 'u8[131072]{0}', space=vmem, size = 0x20000, scoped, tag = 'input window, operand 5, single buffered']
    #allocation6 [shape = 's32[1]{0}', space=sflag, size = 0x4, scoped, tag = 'scoped memory for tpu_custom_call.1']
    #allocation7 [shape = 'u8[16384]{0}', space=vmem, size = 0x4000, scoped, tag = 'output window, operand 0, single buffered']
    #allocation8 [shape = 'u8[8192]{0}', space=vmem, size = 0x2000, scoped, tag = 'output window, operand 1, single buffered']
    #allocation9 [shape = 's32[1]{0}', space=sflag, size = 0x4, scoped, tag = 'scoped memory for tpu_custom_call.1']
    %14 = vsyncpa [#allocation3], 0
    %15 = vsyncpa [#allocation6], 0
    %16 = vsyncpa [#allocation4], 0
    %17 = vsyncpa [#allocation9], 0
    // Predicated region
    $region2: #{tpu_custom_call.1} parent=1 // pred_check
      _
    $region3: #{tpu_custom_call.1} parent=1 // pred_check_branch
      %19 = sbr.rel (0) target = $region5
    $region4: #{tpu_custom_call.1} parent=1 // pred_region
      _
    $region5: #{tpu_custom_call.1} parent=1 // pred_fallthru
      _
    // Predicated region
    $region6: #{tpu_custom_call.1} parent=1 // pred_check
      _
    $region7: #{tpu_custom_call.1} parent=1 // pred_check_branch
      %21 = sbr.rel (0) target = $region9
    $region8: #{tpu_custom_call.1} parent=1 // pred_region
      _
    $region9: #{tpu_custom_call.1} parent=1 // pred_fallthru
      _
    // Predicated region
    $region10: #{tpu_custom_call.1} parent=1 // pred_check
      _
    $region11: #{tpu_custom_call.1} parent=1 // pred_check_branch
      %23 = sbr.rel (0) target = $region13
    $region12: #{tpu_custom_call.1} parent=1 // pred_region
      _
    $region13: #{tpu_custom_call.1} parent=1 // pred_fallthru
      _
    // Predicated region
    $region14: #{tpu_custom_call.1} parent=1 // pred_check
      _
    $region15: #{tpu_custom_call.1} parent=1 // pred_check_branch
      %25 = sbr.rel (0) target = $region17
    $region16: #{tpu_custom_call.1} parent=1 // pred_region
      %s27 = ssub.s32 8192, 8192
      %28 = vsyncadd [#allocation3], %s27
      %s29 = sshll.u32 [#allocation2], 4
      %s30 = int_to_ptr.vmem [resolvable:$true] %s29
      %35 = dma.hbm_to_vmem [thread:$0]  %s3, 8192, %s30, [#allocation3], 256, 256, 16
    $region17: #{tpu_custom_call.1} parent=1 // pred_fallthru
      _
    // Predicated region
    $region18: #{tpu_custom_call.1} parent=1 // pred_check
      _
    $region19: #{tpu_custom_call.1} parent=1 // pred_check_branch
      %37 = sbr.rel (0) target = $region21
    $region20: #{tpu_custom_call.1} parent=1 // pred_region
      _
    $region21: #{tpu_custom_call.1} parent=1 // pred_fallthru
      _
    // Predicated region
    $region22: #{tpu_custom_call.1} parent=1 // pred_check
      _
    $region23: #{tpu_custom_call.1} parent=1 // pred_check_branch
      %39 = sbr.rel (0) target = $region25
    $region24: #{tpu_custom_call.1} parent=1 // pred_region
      %s41 = ssub.s32 4096, 4096
      %42 = vsyncadd [#allocation6], %s41
      %s43 = sshll.u32 [#allocation5], 4
      %s44 = int_to_ptr.vmem [resolvable:$true] %s43
      %49 = dma.hbm_to_vmem [thread:$0]  %s5, 4096, %s44, [#allocation6], 128, 128, 8
    $region25: #{tpu_custom_call.1} parent=1 // pred_fallthru
      _
    // Predicated region
    $region26: #{tpu_custom_call.1} parent=1 // pred_check
      _
    $region27: #{tpu_custom_call.1} parent=1 // pred_check_branch
      %51 = sbr.rel (0) target = $region29
    $region28: #{tpu_custom_call.1} parent=1 // pred_region
      _
    $region29: #{tpu_custom_call.1} parent=1 // pred_fallthru
      _
    // Predicated region
    $region30: #{tpu_custom_call.1} parent=1 // pred_check
      _
    $region31: #{tpu_custom_call.1} parent=1 // pred_check_branch
      %53 = sbr.rel (0) target = $region33
    $region32: #{tpu_custom_call.1} parent=1 // pred_region
      %54 = dma.done [#allocation3], 8192
    $region33: #{tpu_custom_call.1} parent=1 // pred_fallthru
      _
    // Predicated region
    $region34: #{tpu_custom_call.1} parent=1 // pred_check
      _
    $region35: #{tpu_custom_call.1} parent=1 // pred_check_branch
      %56 = sbr.rel (0) target = $region37
    $region36: #{tpu_custom_call.1} parent=1 // pred_region
      %57 = dma.done [#allocation6], 4096
    $region37: #{tpu_custom_call.1} parent=1 // pred_fallthru
      _
    %v58 = vld [vmem:[%s0] sm:$0xff]
    %v59 = vld [vmem:[%s0 + $0x8] sm:$0xff]
    %v60 = vld [vmem:[%s1] sm:$0xff]
    %v61 = vld [vmem:[%s2] sm:$0x3]
    %v63 = vlaneseq
    %v64 = vshrl.u32 %v63, 7
    %v65 = vsub.s32 0, %v64
    %v66 = vrot.slane %v61, %v65
    %v67 = vlaneseq
    %v68 = vshrl.u32 %v67, 7
    %v69 = vsub.s32 1, %v68
    %v70 = vrot.slane %v61, %v69
    %v74 = vcombine.high %v60, %v60
    %vm75 = vcmask 31744
    %v77 = vsel %vm75, %v58, 0
    %v80 = vsel %vm75, %v59, 0
    %vm82 = vcmask 1043456
    %v83 = vsel %vm82, %v60, 0
    %v85 = vsel %vm82, %v74, 0
    %87 = vmatprep.subr.mxu0 %v85
    %88 = vmatpush1.msra.mxu0 %v83
    %89 = vmatprep.subr.mxu0 0.0
    %90 = vmatpush1.msra.mxu0 0.0
    %91 = vmatprep.subr.mxu0 0.0
    %92 = vmatpush1.msra.mxu0 0.0
    %93 = vmatprep.subr.mxu0 0.0
    %94 = vmatpush1.msra.mxu0 0.0
    %95 = vmatprep.subr.mxu0 0.0
    %96 = vmatpush1.msra.mxu0 0.0
    %97 = vmatprep.subr.mxu0 0.0
    %98 = vmatpush1.msra.mxu0 0.0
    %99 = vmatprep.subr.mxu0 0.0
    %100 = vmatpush1.msra.mxu0 0.0
    %101 = vmatprep.subr.mxu0 0.0
    %102 = vmatpush1.msra.mxu0 0.0
    %103 = vmatprep.subr.mxu0 0.0
    %104 = vmatpush1.msra.mxu0 0.0
    %105 = vmatprep.subr.mxu0 0.0
    %106 = vmatpush1.msra.mxu0 0.0
    %107 = vmatprep.subr.mxu0 0.0
    %108 = vmatpush1.msra.mxu0 0.0
    %109 = vmatprep.subr.mxu0 0.0
    %110 = vmatpush1.msra.mxu0 0.0
    %111 = vmatprep.subr.mxu0 0.0
    %112 = vmatpush1.msra.mxu0 0.0
    %113 = vmatprep.subr.mxu0 0.0
    %114 = vmatpush1.msra.mxu0 0.0
    %115 = vmatprep.subr.mxu0 0.0
    %116 = vmatpush1.msra.mxu0 0.0
    %117 = vmatprep.subr.mxu0 0.0
    %118 = vmatpush1.msra.mxu0 0.0
    %119 = vmatprep.subr.mxu0 0.0
    %120 = vmatpush1.msra.mxu0 0.0
    %121 = vmatprep.subr.mxu0 0.0
    %122 = vmatpush1.msra.mxu0 0.0
    %123 = vmatprep.subr.mxu0 0.0
    %124 = vmatpush1.msra.mxu0 0.0
    %125 = vmatprep.subr.mxu0 0.0
    %126 = vmatpush1.msra.mxu0 0.0
    %127 = vmatprep.subr.mxu0 0.0
    %128 = vmatpush1.msra.mxu0 0.0
    %129 = vmatprep.subr.mxu0 0.0
    %130 = vmatpush1.msra.mxu0 0.0
    %131 = vmatprep.subr.mxu0 0.0
    %132 = vmatpush1.msra.mxu0 0.0
    %133 = vmatprep.subr.mxu0 0.0
    %134 = vmatpush1.msra.mxu0 0.0
    %135 = vmatprep.subr.mxu0 0.0
    %136 = vmatpush1.msra.mxu0 0.0
    %137 = vmatprep.subr.mxu0 0.0
    %138 = vmatpush1.msra.mxu0 0.0
    %139 = vmatprep.subr.mxu0 0.0
    %140 = vmatpush1.msra.mxu0 0.0
    %141 = vmatprep.subr.mxu0 0.0
    %142 = vmatpush1.msra.mxu0 0.0
    %143 = vmatprep.subr.mxu0 0.0
    %144 = vmatpush1.msra.mxu0 0.0
    %145 = vmatprep.subr.mxu0 0.0
    %146 = vmatpush1.msra.mxu0 0.0
    %147 = vmatprep.subr.mxu0 0.0
    %148 = vmatpush1.msra.mxu0 0.0
    %149 = vmatprep.subr.mxu0 0.0
    %150 = vmatpush1.msra.mxu0 0.0
    %151 = vmatprep.mubr.f32.mxu0 0.0
    %152 = vmatmul.mubr.f32.gmra.mrb[0].mxu0 %v77
    %v153 = vpop.f32.mrb[0].mxu0
    %v154 = vadd.f32 %v66, %v153
    %v155 = vpop.f32.mrb[0].mxu0
    %v156 = vadd.f32 %v70, %v155
    %157 = vmatprep.mubr.f32.mxu0 0.0
    %158 = vmatmul.mubr.f32.gmra.mrb[0].mxu0 %v80
    %v159 = vpop.f32.mrb[0].mxu0
    %v160 = vadd.f32 %v66, %v159
    %v161 = vpop.f32.mrb[0].mxu0
    %v162 = vadd.f32 %v70, %v161
    %163 = vdwg.mxu0
    %v164 = vld [vmem:[#allocation2] sm:$0xff]
    %v165 = vld [vmem:[#allocation2 + $0x8] sm:$0xff]
    %v166 = vld [vmem:[#allocation2 + $0x10] sm:$0xff]
    %v167 = vld [vmem:[#allocation2 + $0x18] sm:$0xff]
    %v168 = vld [vmem:[#allocation2 + $0x20] sm:$0xff]
    %v169 = vld [vmem:[#allocation2 + $0x28] sm:$0xff]
    %v170 = vld [vmem:[#allocation2 + $0x30] sm:$0xff]
    %v171 = vld [vmem:[#allocation2 + $0x38] sm:$0xff]
    %v172 = vld [vmem:[#allocation2 + $0x40] sm:$0xff]
    %v173 = vld [vmem:[#allocation2 + $0x48] sm:$0xff]
    %v174 = vld [vmem:[#allocation2 + $0x50] sm:$0xff]
    %v175 = vld [vmem:[#allocation2 + $0x58] sm:$0xff]
    %v176 = vld [vmem:[#allocation2 + $0x60] sm:$0xff]
    %v177 = vld [vmem:[#allocation2 + $0x68] sm:$0xff]
    %v178 = vld [vmem:[#allocation2 + $0x70] sm:$0xff]
    %v179 = vld [vmem:[#allocation2 + $0x78] sm:$0xff]
    %v180 = vld [vmem:[#allocation2 + $0x80] sm:$0xff]
    %v181 = vld [vmem:[#allocation2 + $0x88] sm:$0xff]
    %v182 = vld [vmem:[#allocation2 + $0x90] sm:$0xff]
    %v183 = vld [vmem:[#allocation2 + $0x98] sm:$0xff]
    %v184 = vld [vmem:[#allocation2 + $0xa0] sm:$0xff]
    %v185 = vld [vmem:[#allocation2 + $0xa8] sm:$0xff]
    %v186 = vld [vmem:[#allocation2 + $0xb0] sm:$0xff]
    %v187 = vld [vmem:[#allocation2 + $0xb8] sm:$0xff]
    %v188 = vld [vmem:[#allocation2 + $0xc0] sm:$0xff]
    %v189 = vld [vmem:[#allocation2 + $0xc8] sm:$0xff]
    %v190 = vld [vmem:[#allocation2 + $0xd0] sm:$0xff]
    %v191 = vld [vmem:[#allocation2 + $0xd8] sm:$0xff]
    %v192 = vld [vmem:[#allocation2 + $0xe0] sm:$0xff]
    %v193 = vld [vmem:[#allocation2 + $0xe8] sm:$0xff]
    %v194 = vld [vmem:[#allocation2 + $0xf0] sm:$0xff]
    %v195 = vld [vmem:[#allocation2 + $0xf8] sm:$0xff]
    %v196 = vld [vmem:[#allocation2 + $0x100] sm:$0xff]
    %v197 = vld [vmem:[#allocation2 + $0x108] sm:$0xff]
    %v198 = vld [vmem:[#allocation2 + $0x110] sm:$0xff]
    %v199 = vld [vmem:[#allocation2 + $0x118] sm:$0xff]
    %v200 = vld [vmem:[#allocation2 + $0x120] sm:$0xff]
    %v201 = vld [vmem:[#allocation2 + $0x128] sm:$0xff]
    %v202 = vld [vmem:[#allocation2 + $0x130] sm:$0xff]
    %v203 = vld [vmem:[#allocation2 + $0x138] sm:$0xff]
    %v204 = vld [vmem:[#allocation2 + $0x140] sm:$0xff]
    %v205 = vld [vmem:[#allocation2 + $0x148] sm:$0xff]
    %v206 = vld [vmem:[#allocation2 + $0x150] sm:$0xff]
    %v207 = vld [vmem:[#allocation2 + $0x158] sm:$0xff]
    %v208 = vld [vmem:[#allocation2 + $0x160] sm:$0xff]
    %v209 = vld [vmem:[#allocation2 + $0x168] sm:$0xff]
    %v210 = vld [vmem:[#allocation2 + $0x170] sm:$0xff]
    %v211 = vld [vmem:[#allocation2 + $0x178] sm:$0xff]
    %v212 = vld [vmem:[#allocation2 + $0x180] sm:$0xff]
    %v213 = vld [vmem:[#allocation2 + $0x188] sm:$0xff]
    %v214 = vld [vmem:[#allocation2 + $0x190] sm:$0xff]
    %v215 = vld [vmem:[#allocation2 + $0x198] sm:$0xff]
    %v216 = vld [vmem:[#allocation2 + $0x1a0] sm:$0xff]
    %v217 = vld [vmem:[#allocation2 + $0x1a8] sm:$0xff]
    %v218 = vld [vmem:[#allocation2 + $0x1b0] sm:$0xff]
    %v219 = vld [vmem:[#allocation2 + $0x1b8] sm:$0xff]
    %v220 = vld [vmem:[#allocation2 + $0x1c0] sm:$0xff]
    %v221 = vld [vmem:[#allocation2 + $0x1c8] sm:$0xff]
    %v222 = vld [vmem:[#allocation2 + $0x1d0] sm:$0xff]
    %v223 = vld [vmem:[#allocation2 + $0x1d8] sm:$0xff]
    %v224 = vld [vmem:[#allocation2 + $0x1e0] sm:$0xff]
    %v225 = vld [vmem:[#allocation2 + $0x1e8] sm:$0xff]
    %v226 = vld [vmem:[#allocation2 + $0x1f0] sm:$0xff]
    %v227 = vld [vmem:[#allocation2 + $0x1f8] sm:$0xff]
    %v228 = vld [vmem:[%s4] sm:$0x3]
    %v230 = vlaneseq
    %v231 = vshrl.u32 %v230, 7
    %v232 = vsub.s32 0, %v231
    %v233 = vrot.slane %v228, %v232
    %v234 = vlaneseq
    %v235 = vshrl.u32 %v234, 7
    %v236 = vsub.s32 1, %v235
    %v237 = vrot.slane %v228, %v236
    %240 = vmatprep.subr.mxu0 %v165
    %241 = vmatpush1.msra.mxu0 %v164
    %242 = vmatprep.subr.mxu0 %v167
    %243 = vmatpush1.msra.mxu0 %v166
    %244 = vmatprep.subr.mxu0 %v169
    %245 = vmatpush1.msra.mxu0 %v168
    %246 = vmatprep.subr.mxu0 %v171
    %247 = vmatpush1.msra.mxu0 %v170
    %248 = vmatprep.subr.mxu0 %v173
    %249 = vmatpush1.msra.mxu0 %v172
    %250 = vmatprep.subr.mxu0 %v175
    %251 = vmatpush1.msra.mxu0 %v174
    %252 = vmatprep.subr.mxu0 %v177
    %253 = vmatpush1.msra.mxu0 %v176
    %254 = vmatprep.subr.mxu0 %v179
    %255 = vmatpush1.msra.mxu0 %v178
    %256 = vmatprep.subr.mxu0 %v181
    %257 = vmatpush1.msra.mxu0 %v180
    %258 = vmatprep.subr.mxu0 %v183
    %259 = vmatpush1.msra.mxu0 %v182
    %260 = vmatprep.subr.mxu0 %v185
    %261 = vmatpush1.msra.mxu0 %v184
    %262 = vmatprep.subr.mxu0 %v187
    %263 = vmatpush1.msra.mxu0 %v186
    %264 = vmatprep.subr.mxu0 %v189
    %265 = vmatpush1.msra.mxu0 %v188
    %266 = vmatprep.subr.mxu0 %v191
    %267 = vmatpush1.msra.mxu0 %v190
    %268 = vmatprep.subr.mxu0 %v193
    %269 = vmatpush1.msra.mxu0 %v192
    %270 = vmatprep.subr.mxu0 %v195
    %271 = vmatpush1.msra.mxu0 %v194
    %272 = vmatprep.subr.mxu0 %v197
    %273 = vmatpush1.msra.mxu0 %v196
    %274 = vmatprep.subr.mxu0 %v199
    %275 = vmatpush1.msra.mxu0 %v198
    %276 = vmatprep.subr.mxu0 %v201
    %277 = vmatpush1.msra.mxu0 %v200
    %278 = vmatprep.subr.mxu0 %v203
    %279 = vmatpush1.msra.mxu0 %v202
    %280 = vmatprep.subr.mxu0 %v205
    %281 = vmatpush1.msra.mxu0 %v204
    %282 = vmatprep.subr.mxu0 %v207
    %283 = vmatpush1.msra.mxu0 %v206
    %284 = vmatprep.subr.mxu0 %v209
    %285 = vmatpush1.msra.mxu0 %v208
    %286 = vmatprep.subr.mxu0 %v211
    %287 = vmatpush1.msra.mxu0 %v210
    %288 = vmatprep.subr.mxu0 %v213
    %289 = vmatpush1.msra.mxu0 %v212
    %290 = vmatprep.subr.mxu0 %v215
    %291 = vmatpush1.msra.mxu0 %v214
    %292 = vmatprep.subr.mxu0 %v217
    %293 = vmatpush1.msra.mxu0 %v216
    %294 = vmatprep.subr.mxu0 %v219
    %295 = vmatpush1.msra.mxu0 %v218
    %296 = vmatprep.subr.mxu0 %v221
    %297 = vmatpush1.msra.mxu0 %v220
    %298 = vmatprep.subr.mxu0 %v223
    %299 = vmatpush1.msra.mxu0 %v222
    %300 = vmatprep.subr.mxu0 %v225
    %301 = vmatpush1.msra.mxu0 %v224
    %302 = vmatprep.subr.mxu0 %v227
    %303 = vmatpush1.msra.mxu0 %v226
    %304 = vmatprep.mubr.f32.mxu0 %v237
    %305 = vmatmul.mubr.f32.gmra.mrb[0].mxu0 %v233
    %v306 = vpop.f32.mrb[0].mxu0
    %v307 = vadd.f32 0.0, %v306
    %v308 = vpop.f32.mrb[0].mxu0
    %v309 = vadd.f32 0.0, %v308
    %310 = vdwg.mxu0
    %v311 = vmul.f32 %v233, 0.95
    %v312 = vmul.f32 %v237, 0.95
    %v313 = vadd.f32 %v154, %v307
    %v314 = vadd.f32 %v156, %v309
    %v315 = vmax.f32 %v313, 0.0
    %v316 = vmax.f32 %v314, 0.0
    %v317 = vadd.f32 %v311, %v315
    %v318 = vadd.f32 %v312, %v316
    %319 = vmatprep.subr.mxu0 %v165
    %320 = vmatpush1.msra.mxu0 %v164
    %321 = vmatprep.subr.mxu0 %v167
    %322 = vmatpush1.msra.mxu0 %v166
    %323 = vmatprep.subr.mxu0 %v169
    %324 = vmatpush1.msra.mxu0 %v168
    %325 = vmatprep.subr.mxu0 %v171
    %326 = vmatpush1.msra.mxu0 %v170
    %327 = vmatprep.subr.mxu0 %v173
    %328 = vmatpush1.msra.mxu0 %v172
    %329 = vmatprep.subr.mxu0 %v175
    %330 = vmatpush1.msra.mxu0 %v174
    %331 = vmatprep.subr.mxu0 %v177
    %332 = vmatpush1.msra.mxu0 %v176
    %333 = vmatprep.subr.mxu0 %v179
    %334 = vmatpush1.msra.mxu0 %v178
    %335 = vmatprep.subr.mxu0 %v181
    %336 = vmatpush1.msra.mxu0 %v180
    %337 = vmatprep.subr.mxu0 %v183
    %338 = vmatpush1.msra.mxu0 %v182
    %339 = vmatprep.subr.mxu0 %v185
    %340 = vmatpush1.msra.mxu0 %v184
    %341 = vmatprep.subr.mxu0 %v187
    %342 = vmatpush1.msra.mxu0 %v186
    %343 = vmatprep.subr.mxu0 %v189
    %344 = vmatpush1.msra.mxu0 %v188
    %345 = vmatprep.subr.mxu0 %v191
    %346 = vmatpush1.msra.mxu0 %v190
    %347 = vmatprep.subr.mxu0 %v193
    %348 = vmatpush1.msra.mxu0 %v192
    %349 = vmatprep.subr.mxu0 %v195
    %350 = vmatpush1.msra.mxu0 %v194
    %351 = vmatprep.subr.mxu0 %v197
    %352 = vmatpush1.msra.mxu0 %v196
    %353 = vmatprep.subr.mxu0 %v199
    %354 = vmatpush1.msra.mxu0 %v198
    %355 = vmatprep.subr.mxu0 %v201
    %356 = vmatpush1.msra.mxu0 %v200
    %357 = vmatprep.subr.mxu0 %v203
    %358 = vmatpush1.msra.mxu0 %v202
    %359 = vmatprep.subr.mxu0 %v205
    %360 = vmatpush1.msra.mxu0 %v204
    %361 = vmatprep.subr.mxu0 %v207
    %362 = vmatpush1.msra.mxu0 %v206
    %363 = vmatprep.subr.mxu0 %v209
    %364 = vmatpush1.msra.mxu0 %v208
    %365 = vmatprep.subr.mxu0 %v211
    %366 = vmatpush1.msra.mxu0 %v210
    %367 = vmatprep.subr.mxu0 %v213
    %368 = vmatpush1.msra.mxu0 %v212
    %369 = vmatprep.subr.mxu0 %v215
    %370 = vmatpush1.msra.mxu0 %v214
    %371 = vmatprep.subr.mxu0 %v217
    %372 = vmatpush1.msra.mxu0 %v216
    %373 = vmatprep.subr.mxu0 %v219
    %374 = vmatpush1.msra.mxu0 %v218
    %375 = vmatprep.subr.mxu0 %v221
    %376 = vmatpush1.msra.mxu0 %v220
    %377 = vmatprep.subr.mxu0 %v223
    %378 = vmatpush1.msra.mxu0 %v222
    %379 = vmatprep.subr.mxu0 %v225
    %380 = vmatpush1.msra.mxu0 %v224
    %381 = vmatprep.subr.mxu0 %v227
    %382 = vmatpush1.msra.mxu0 %v226
    %383 = vmatprep.mubr.f32.mxu0 %v318
    %384 = vmatmul.mubr.f32.gmra.mrb[0].mxu0 %v317
    %v385 = vpop.f32.mrb[0].mxu0
    %v386 = vadd.f32 0.0, %v385
    %v387 = vpop.f32.mrb[0].mxu0
    %v388 = vadd.f32 0.0, %v387
    %389 = vdwg.mxu0
    %v390 = vmul.f32 %v317, 0.95
    %v391 = vmul.f32 %v318, 0.95
    %v394 = vrot.slane %v386, 6
    %v395 = vrot.slane %v388, 6
    %v398 = vadd.f32 %v154, %v394
    %v399 = vadd.f32 %v156, %v395
    %v400 = vmax.f32 %v398, 0.0
    %v401 = vmax.f32 %v399, 0.0
    %v404 = vrot.slane %v400, 2
    %v405 = vrot.slane %v401, 2
    %v408 = vadd.f32 %v390, %v404
    %v409 = vadd.f32 %v391, %v405
    %410 = vmatprep.subr.mxu0 %v165
    %411 = vmatpush1.msra.mxu0 %v164
    %412 = vmatprep.subr.mxu0 %v167
    %413 = vmatpush1.msra.mxu0 %v166
    %414 = vmatprep.subr.mxu0 %v169
    %415 = vmatpush1.msra.mxu0 %v168
    %416 = vmatprep.subr.mxu0 %v171
    %417 = vmatpush1.msra.mxu0 %v170
    %418 = vmatprep.subr.mxu0 %v173
    %419 = vmatpush1.msra.mxu0 %v172
    %420 = vmatprep.subr.mxu0 %v175
    %421 = vmatpush1.msra.mxu0 %v174
    %422 = vmatprep.subr.mxu0 %v177
    %423 = vmatpush1.msra.mxu0 %v176
    %424 = vmatprep.subr.mxu0 %v179
    %425 = vmatpush1.msra.mxu0 %v178
    %426 = vmatprep.subr.mxu0 %v181
    %427 = vmatpush1.msra.mxu0 %v180
    %428 = vmatprep.subr.mxu0 %v183
    %429 = vmatpush1.msra.mxu0 %v182
    %430 = vmatprep.subr.mxu0 %v185
    %431 = vmatpush1.msra.mxu0 %v184
    %432 = vmatprep.subr.mxu0 %v187
    %433 = vmatpush1.msra.mxu0 %v186
    %434 = vmatprep.subr.mxu0 %v189
    %435 = vmatpush1.msra.mxu0 %v188
    %436 = vmatprep.subr.mxu0 %v191
    %437 = vmatpush1.msra.mxu0 %v190
    %438 = vmatprep.subr.mxu0 %v193
    %439 = vmatpush1.msra.mxu0 %v192
    %440 = vmatprep.subr.mxu0 %v195
    %441 = vmatpush1.msra.mxu0 %v194
    %442 = vmatprep.subr.mxu0 %v197
    %443 = vmatpush1.msra.mxu0 %v196
    %444 = vmatprep.subr.mxu0 %v199
    %445 = vmatpush1.msra.mxu0 %v198
    %446 = vmatprep.subr.mxu0 %v201
    %447 = vmatpush1.msra.mxu0 %v200
    %448 = vmatprep.subr.mxu0 %v203
    %449 = vmatpush1.msra.mxu0 %v202
    %450 = vmatprep.subr.mxu0 %v205
    %451 = vmatpush1.msra.mxu0 %v204
    %452 = vmatprep.subr.mxu0 %v207
    %453 = vmatpush1.msra.mxu0 %v206
    %454 = vmatprep.subr.mxu0 %v209
    %455 = vmatpush1.msra.mxu0 %v208
    %456 = vmatprep.subr.mxu0 %v211
    %457 = vmatpush1.msra.mxu0 %v210
    %458 = vmatprep.subr.mxu0 %v213
    %459 = vmatpush1.msra.mxu0 %v212
    %460 = vmatprep.subr.mxu0 %v215
    %461 = vmatpush1.msra.mxu0 %v214
    %462 = vmatprep.subr.mxu0 %v217
    %463 = vmatpush1.msra.mxu0 %v216
    %464 = vmatprep.subr.mxu0 %v219
    %465 = vmatpush1.msra.mxu0 %v218
    %466 = vmatprep.subr.mxu0 %v221
    %467 = vmatpush1.msra.mxu0 %v220
    %468 = vmatprep.subr.mxu0 %v223
    %469 = vmatpush1.msra.mxu0 %v222
    %470 = vmatprep.subr.mxu0 %v225
    %471 = vmatpush1.msra.mxu0 %v224
    %472 = vmatprep.subr.mxu0 %v227
    %473 = vmatpush1.msra.mxu0 %v226
    %474 = vmatprep.mubr.f32.mxu0 %v409
    %475 = vmatmul.mubr.f32.gmra.mrb[0].mxu0 %v408
    %v476 = vpop.f32.mrb[0].mxu0
    %v477 = vadd.f32 0.0, %v476
    %v478 = vpop.f32.mrb[0].mxu0
    %v479 = vadd.f32 0.0, %v478
    %480 = vdwg.mxu0
    %v481 = vmul.f32 %v408, 0.95
    %v482 = vmul.f32 %v409, 0.95
    %v485 = vrot.slane %v477, 4
    %v486 = vrot.slane %v479, 4
    %v489 = vadd.f32 %v154, %v485
    %v490 = vadd.f32 %v156, %v486
    %v491 = vmax.f32 %v489, 0.0
    %v492 = vmax.f32 %v490, 0.0
    %v495 = vrot.slane %v491, 4
    %v496 = vrot.slane %v492, 4
    %v499 = vadd.f32 %v481, %v495
    %v500 = vadd.f32 %v482, %v496
    %501 = vmatprep.subr.mxu0 %v165
    %502 = vmatpush1.msra.mxu0 %v164
    %503 = vmatprep.subr.mxu0 %v167
    %504 = vmatpush1.msra.mxu0 %v166
    %505 = vmatprep.subr.mxu0 %v169
    %506 = vmatpush1.msra.mxu0 %v168
    %507 = vmatprep.subr.mxu0 %v171
    %508 = vmatpush1.msra.mxu0 %v170
    %509 = vmatprep.subr.mxu0 %v173
    %510 = vmatpush1.msra.mxu0 %v172
    %511 = vmatprep.subr.mxu0 %v175
    %512 = vmatpush1.msra.mxu0 %v174
    %513 = vmatprep.subr.mxu0 %v177
    %514 = vmatpush1.msra.mxu0 %v176
    %515 = vmatprep.subr.mxu0 %v179
    %516 = vmatpush1.msra.mxu0 %v178
    %517 = vmatprep.subr.mxu0 %v181
    %518 = vmatpush1.msra.mxu0 %v180
    %519 = vmatprep.subr.mxu0 %v183
    %520 = vmatpush1.msra.mxu0 %v182
    %521 = vmatprep.subr.mxu0 %v185
    %522 = vmatpush1.msra.mxu0 %v184
    %523 = vmatprep.subr.mxu0 %v187
    %524 = vmatpush1.msra.mxu0 %v186
    %525 = vmatprep.subr.mxu0 %v189
    %526 = vmatpush1.msra.mxu0 %v188
    %527 = vmatprep.subr.mxu0 %v191
    %528 = vmatpush1.msra.mxu0 %v190
    %529 = vmatprep.subr.mxu0 %v193
    %530 = vmatpush1.msra.mxu0 %v192
    %531 = vmatprep.subr.mxu0 %v195
    %532 = vmatpush1.msra.mxu0 %v194
    %533 = vmatprep.subr.mxu0 %v197
    %534 = vmatpush1.msra.mxu0 %v196
    %535 = vmatprep.subr.mxu0 %v199
    %536 = vmatpush1.msra.mxu0 %v198
    %537 = vmatprep.subr.mxu0 %v201
    %538 = vmatpush1.msra.mxu0 %v200
    %539 = vmatprep.subr.mxu0 %v203
    %540 = vmatpush1.msra.mxu0 %v202
    %541 = vmatprep.subr.mxu0 %v205
    %542 = vmatpush1.msra.mxu0 %v204
    %543 = vmatprep.subr.mxu0 %v207
    %544 = vmatpush1.msra.mxu0 %v206
    %545 = vmatprep.subr.mxu0 %v209
    %546 = vmatpush1.msra.mxu0 %v208
    %547 = vmatprep.subr.mxu0 %v211
    %548 = vmatpush1.msra.mxu0 %v210
    %549 = vmatprep.subr.mxu0 %v213
    %550 = vmatpush1.msra.mxu0 %v212
    %551 = vmatprep.subr.mxu0 %v215
    %552 = vmatpush1.msra.mxu0 %v214
    %553 = vmatprep.subr.mxu0 %v217
    %554 = vmatpush1.msra.mxu0 %v216
    %555 = vmatprep.subr.mxu0 %v219
    %556 = vmatpush1.msra.mxu0 %v218
    %557 = vmatprep.subr.mxu0 %v221
    %558 = vmatpush1.msra.mxu0 %v220
    %559 = vmatprep.subr.mxu0 %v223
    %560 = vmatpush1.msra.mxu0 %v222
    %561 = vmatprep.subr.mxu0 %v225
    %562 = vmatpush1.msra.mxu0 %v224
    %563 = vmatprep.subr.mxu0 %v227
    %564 = vmatpush1.msra.mxu0 %v226
    %565 = vmatprep.mubr.f32.mxu0 %v500
    %566 = vmatmul.mubr.f32.gmra.mrb[0].mxu0 %v499
    %v567 = vpop.f32.mrb[0].mxu0
    %v568 = vadd.f32 0.0, %v567
    %v569 = vpop.f32.mrb[0].mxu0
    %v570 = vadd.f32 0.0, %v569
    %571 = vdwg.mxu0
    %v572 = vmul.f32 %v499, 0.95
    %v573 = vmul.f32 %v500, 0.95
    %v576 = vrot.slane %v568, 2
    %v577 = vrot.slane %v570, 2
    %v580 = vadd.f32 %v154, %v576
    %v581 = vadd.f32 %v156, %v577
    %v582 = vmax.f32 %v580, 0.0
    %v583 = vmax.f32 %v581, 0.0
    %v586 = vrot.slane %v582, 6
    %v587 = vrot.slane %v583, 6
    %v590 = vadd.f32 %v572, %v586
    %v591 = vadd.f32 %v573, %v587
    %592 = vmatprep.subr.mxu0 %v165
    %593 = vmatpush1.msra.mxu0 %v164
    %594 = vmatprep.subr.mxu0 %v167
    %595 = vmatpush1.msra.mxu0 %v166
    %596 = vmatprep.subr.mxu0 %v169
    %597 = vmatpush1.msra.mxu0 %v168
    %598 = vmatprep.subr.mxu0 %v171
    %599 = vmatpush1.msra.mxu0 %v170
    %600 = vmatprep.subr.mxu0 %v173
    %601 = vmatpush1.msra.mxu0 %v172
    %602 = vmatprep.subr.mxu0 %v175
    %603 = vmatpush1.msra.mxu0 %v174
    %604 = vmatprep.subr.mxu0 %v177
    %605 = vmatpush1.msra.mxu0 %v176
    %606 = vmatprep.subr.mxu0 %v179
    %607 = vmatpush1.msra.mxu0 %v178
    %608 = vmatprep.subr.mxu0 %v181
    %609 = vmatpush1.msra.mxu0 %v180
    %610 = vmatprep.subr.mxu0 %v183
    %611 = vmatpush1.msra.mxu0 %v182
    %612 = vmatprep.subr.mxu0 %v185
    %613 = vmatpush1.msra.mxu0 %v184
    %614 = vmatprep.subr.mxu0 %v187
    %615 = vmatpush1.msra.mxu0 %v186
    %616 = vmatprep.subr.mxu0 %v189
    %617 = vmatpush1.msra.mxu0 %v188
    %618 = vmatprep.subr.mxu0 %v191
    %619 = vmatpush1.msra.mxu0 %v190
    %620 = vmatprep.subr.mxu0 %v193
    %621 = vmatpush1.msra.mxu0 %v192
    %622 = vmatprep.subr.mxu0 %v195
    %623 = vmatpush1.msra.mxu0 %v194
    %624 = vmatprep.subr.mxu0 %v197
    %625 = vmatpush1.msra.mxu0 %v196
    %626 = vmatprep.subr.mxu0 %v199
    %627 = vmatpush1.msra.mxu0 %v198
    %628 = vmatprep.subr.mxu0 %v201
    %629 = vmatpush1.msra.mxu0 %v200
    %630 = vmatprep.subr.mxu0 %v203
    %631 = vmatpush1.msra.mxu0 %v202
    %632 = vmatprep.subr.mxu0 %v205
    %633 = vmatpush1.msra.mxu0 %v204
    %634 = vmatprep.subr.mxu0 %v207
    %635 = vmatpush1.msra.mxu0 %v206
    %636 = vmatprep.subr.mxu0 %v209
    %637 = vmatpush1.msra.mxu0 %v208
    %638 = vmatprep.subr.mxu0 %v211
    %639 = vmatpush1.msra.mxu0 %v210
    %640 = vmatprep.subr.mxu0 %v213
    %641 = vmatpush1.msra.mxu0 %v212
    %642 = vmatprep.subr.mxu0 %v215
    %643 = vmatpush1.msra.mxu0 %v214
    %644 = vmatprep.subr.mxu0 %v217
    %645 = vmatpush1.msra.mxu0 %v216
    %646 = vmatprep.subr.mxu0 %v219
    %647 = vmatpush1.msra.mxu0 %v218
    %648 = vmatprep.subr.mxu0 %v221
    %649 = vmatpush1.msra.mxu0 %v220
    %650 = vmatprep.subr.mxu0 %v223
    %651 = vmatpush1.msra.mxu0 %v222
    %652 = vmatprep.subr.mxu0 %v225
    %653 = vmatpush1.msra.mxu0 %v224
    %654 = vmatprep.subr.mxu0 %v227
    %655 = vmatpush1.msra.mxu0 %v226
    %656 = vmatprep.mubr.f32.mxu0 %v591
    %657 = vmatmul.mubr.f32.gmra.mrb[0].mxu0 %v590
    %v658 = vpop.f32.mrb[0].mxu0
    %v659 = vadd.f32 0.0, %v658
    %v660 = vpop.f32.mrb[0].mxu0
    %v661 = vadd.f32 0.0, %v660
    %662 = vdwg.mxu0
    %v663 = vmul.f32 %v590, 0.95
    %v664 = vmul.f32 %v591, 0.95
    %v665 = vadd.f32 %v160, %v659
    %v666 = vadd.f32 %v162, %v661
    %v667 = vmax.f32 %v665, 0.0
    %v668 = vmax.f32 %v666, 0.0
    %v669 = vadd.f32 %v663, %v667
    %v670 = vadd.f32 %v664, %v668
    %671 = vmatprep.subr.mxu0 %v165
    %672 = vmatpush1.msra.mxu0 %v164
    %673 = vmatprep.subr.mxu0 %v167
    %674 = vmatpush1.msra.mxu0 %v166
    %675 = vmatprep.subr.mxu0 %v169
    %676 = vmatpush1.msra.mxu0 %v168
    %677 = vmatprep.subr.mxu0 %v171
    %678 = vmatpush1.msra.mxu0 %v170
    %679 = vmatprep.subr.mxu0 %v173
    %680 = vmatpush1.msra.mxu0 %v172
    %681 = vmatprep.subr.mxu0 %v175
    %682 = vmatpush1.msra.mxu0 %v174
    %683 = vmatprep.subr.mxu0 %v177
    %684 = vmatpush1.msra.mxu0 %v176
    %685 = vmatprep.subr.mxu0 %v179
    %686 = vmatpush1.msra.mxu0 %v178
    %687 = vmatprep.subr.mxu0 %v181
    %688 = vmatpush1.msra.mxu0 %v180
    %689 = vmatprep.subr.mxu0 %v183
    %690 = vmatpush1.msra.mxu0 %v182
    %691 = vmatprep.subr.mxu0 %v185
    %692 = vmatpush1.msra.mxu0 %v184
    %693 = vmatprep.subr.mxu0 %v187
    %694 = vmatpush1.msra.mxu0 %v186
    %695 = vmatprep.subr.mxu0 %v189
    %696 = vmatpush1.msra.mxu0 %v188
    %697 = vmatprep.subr.mxu0 %v191
    %698 = vmatpush1.msra.mxu0 %v190
    %699 = vmatprep.subr.mxu0 %v193
    %700 = vmatpush1.msra.mxu0 %v192
    %701 = vmatprep.subr.mxu0 %v195
    %702 = vmatpush1.msra.mxu0 %v194
    %703 = vmatprep.subr.mxu0 %v197
    %704 = vmatpush1.msra.mxu0 %v196
    %705 = vmatprep.subr.mxu0 %v199
    %706 = vmatpush1.msra.mxu0 %v198
    %707 = vmatprep.subr.mxu0 %v201
    %708 = vmatpush1.msra.mxu0 %v200
    %709 = vmatprep.subr.mxu0 %v203
    %710 = vmatpush1.msra.mxu0 %v202
    %711 = vmatprep.subr.mxu0 %v205
    %712 = vmatpush1.msra.mxu0 %v204
    %713 = vmatprep.subr.mxu0 %v207
    %714 = vmatpush1.msra.mxu0 %v206
    %715 = vmatprep.subr.mxu0 %v209
    %716 = vmatpush1.msra.mxu0 %v208
    %717 = vmatprep.subr.mxu0 %v211
    %718 = vmatpush1.msra.mxu0 %v210
    %719 = vmatprep.subr.mxu0 %v213
    %720 = vmatpush1.msra.mxu0 %v212
    %721 = vmatprep.subr.mxu0 %v215
    %722 = vmatpush1.msra.mxu0 %v214
    %723 = vmatprep.subr.mxu0 %v217
    %724 = vmatpush1.msra.mxu0 %v216
    %725 = vmatprep.subr.mxu0 %v219
    %726 = vmatpush1.msra.mxu0 %v218
    %727 = vmatprep.subr.mxu0 %v221
    %728 = vmatpush1.msra.mxu0 %v220
    %729 = vmatprep.subr.mxu0 %v223
    %730 = vmatpush1.msra.mxu0 %v222
    %731 = vmatprep.subr.mxu0 %v225
    %732 = vmatpush1.msra.mxu0 %v224
    %733 = vmatprep.subr.mxu0 %v227
    %734 = vmatpush1.msra.mxu0 %v226
    %735 = vmatprep.mubr.f32.mxu0 %v670
    %736 = vmatmul.mubr.f32.gmra.mrb[0].mxu0 %v669
    %v737 = vpop.f32.mrb[0].mxu0
    %v738 = vadd.f32 0.0, %v737
    %v739 = vpop.f32.mrb[0].mxu0
    %v740 = vadd.f32 0.0, %v739
    %741 = vdwg.mxu0
    %v742 = vmul.f32 %v669, 0.95
    %v743 = vmul.f32 %v670, 0.95
    %v746 = vrot.slane %v738, 6
    %v747 = vrot.slane %v740, 6
    %v750 = vadd.f32 %v160, %v746
    %v751 = vadd.f32 %v162, %v747
    %v752 = vmax.f32 %v750, 0.0
    %v753 = vmax.f32 %v751, 0.0
    %v756 = vrot.slane %v752, 2
    %v757 = vrot.slane %v753, 2
    %v760 = vadd.f32 %v742, %v756
    %v761 = vadd.f32 %v743, %v757
    %762 = vmatprep.subr.mxu0 %v165
    %763 = vmatpush1.msra.mxu0 %v164
    %764 = vmatprep.subr.mxu0 %v167
    %765 = vmatpush1.msra.mxu0 %v166
    %766 = vmatprep.subr.mxu0 %v169
    %767 = vmatpush1.msra.mxu0 %v168
    %768 = vmatprep.subr.mxu0 %v171
    %769 = vmatpush1.msra.mxu0 %v170
    %770 = vmatprep.subr.mxu0 %v173
    %771 = vmatpush1.msra.mxu0 %v172
    %772 = vmatprep.subr.mxu0 %v175
    %773 = vmatpush1.msra.mxu0 %v174
    %774 = vmatprep.subr.mxu0 %v177
    %775 = vmatpush1.msra.mxu0 %v176
    %776 = vmatprep.subr.mxu0 %v179
    %777 = vmatpush1.msra.mxu0 %v178
    %778 = vmatprep.subr.mxu0 %v181
    %779 = vmatpush1.msra.mxu0 %v180
    %780 = vmatprep.subr.mxu0 %v183
    %781 = vmatpush1.msra.mxu0 %v182
    %782 = vmatprep.subr.mxu0 %v185
    %783 = vmatpush1.msra.mxu0 %v184
    %784 = vmatprep.subr.mxu0 %v187
    %785 = vmatpush1.msra.mxu0 %v186
    %786 = vmatprep.subr.mxu0 %v189
    %787 = vmatpush1.msra.mxu0 %v188
    %788 = vmatprep.subr.mxu0 %v191
    %789 = vmatpush1.msra.mxu0 %v190
    %790 = vmatprep.subr.mxu0 %v193
    %791 = vmatpush1.msra.mxu0 %v192
    %792 = vmatprep.subr.mxu0 %v195
    %793 = vmatpush1.msra.mxu0 %v194
    %794 = vmatprep.subr.mxu0 %v197
    %795 = vmatpush1.msra.mxu0 %v196
    %796 = vmatprep.subr.mxu0 %v199
    %797 = vmatpush1.msra.mxu0 %v198
    %798 = vmatprep.subr.mxu0 %v201
    %799 = vmatpush1.msra.mxu0 %v200
    %800 = vmatprep.subr.mxu0 %v203
    %801 = vmatpush1.msra.mxu0 %v202
    %802 = vmatprep.subr.mxu0 %v205
    %803 = vmatpush1.msra.mxu0 %v204
    %804 = vmatprep.subr.mxu0 %v207
    %805 = vmatpush1.msra.mxu0 %v206
    %806 = vmatprep.subr.mxu0 %v209
    %807 = vmatpush1.msra.mxu0 %v208
    %808 = vmatprep.subr.mxu0 %v211
    %809 = vmatpush1.msra.mxu0 %v210
    %810 = vmatprep.subr.mxu0 %v213
    %811 = vmatpush1.msra.mxu0 %v212
    %812 = vmatprep.subr.mxu0 %v215
    %813 = vmatpush1.msra.mxu0 %v214
    %814 = vmatprep.subr.mxu0 %v217
    %815 = vmatpush1.msra.mxu0 %v216
    %816 = vmatprep.subr.mxu0 %v219
    %817 = vmatpush1.msra.mxu0 %v218
    %818 = vmatprep.subr.mxu0 %v221
    %819 = vmatpush1.msra.mxu0 %v220
    %820 = vmatprep.subr.mxu0 %v223
    %821 = vmatpush1.msra.mxu0 %v222
    %822 = vmatprep.subr.mxu0 %v225
    %823 = vmatpush1.msra.mxu0 %v224
    %824 = vmatprep.subr.mxu0 %v227
    %825 = vmatpush1.msra.mxu0 %v226
    %826 = vmatprep.mubr.f32.mxu0 %v761
    %827 = vmatmul.mubr.f32.gmra.mrb[0].mxu0 %v760
    %v828 = vpop.f32.mrb[0].mxu0
    %v829 = vadd.f32 0.0, %v828
    %v830 = vpop.f32.mrb[0].mxu0
    %v831 = vadd.f32 0.0, %v830
    %832 = vdwg.mxu0
    %v833 = vmul.f32 %v760, 0.95
    %v834 = vmul.f32 %v761, 0.95
    %v837 = vrot.slane %v829, 4
    %v838 = vrot.slane %v831, 4
    %v841 = vadd.f32 %v160, %v837
    %v842 = vadd.f32 %v162, %v838
    %v843 = vmax.f32 %v841, 0.0
    %v844 = vmax.f32 %v842, 0.0
    %v847 = vrot.slane %v843, 4
    %v848 = vrot.slane %v844, 4
    %v851 = vadd.f32 %v833, %v847
    %v852 = vadd.f32 %v834, %v848
    %853 = vmatprep.subr.mxu0 %v165
    %854 = vmatpush1.msra.mxu0 %v164
    %855 = vmatprep.subr.mxu0 %v167
    %856 = vmatpush1.msra.mxu0 %v166
    %857 = vmatprep.subr.mxu0 %v169
    %858 = vmatpush1.msra.mxu0 %v168
    %859 = vmatprep.subr.mxu0 %v171
    %860 = vmatpush1.msra.mxu0 %v170
    %861 = vmatprep.subr.mxu0 %v173
    %862 = vmatpush1.msra.mxu0 %v172
    %863 = vmatprep.subr.mxu0 %v175
    %864 = vmatpush1.msra.mxu0 %v174
    %865 = vmatprep.subr.mxu0 %v177
    %866 = vmatpush1.msra.mxu0 %v176
    %867 = vmatprep.subr.mxu0 %v179
    %868 = vmatpush1.msra.mxu0 %v178
    %869 = vmatprep.subr.mxu0 %v181
    %870 = vmatpush1.msra.mxu0 %v180
    %871 = vmatprep.subr.mxu0 %v183
    %872 = vmatpush1.msra.mxu0 %v182
    %873 = vmatprep.subr.mxu0 %v185
    %874 = vmatpush1.msra.mxu0 %v184
    %875 = vmatprep.subr.mxu0 %v187
    %876 = vmatpush1.msra.mxu0 %v186
    %877 = vmatprep.subr.mxu0 %v189
    %878 = vmatpush1.msra.mxu0 %v188
    %879 = vmatprep.subr.mxu0 %v191
    %880 = vmatpush1.msra.mxu0 %v190
    %881 = vmatprep.subr.mxu0 %v193
    %882 = vmatpush1.msra.mxu0 %v192
    %883 = vmatprep.subr.mxu0 %v195
    %884 = vmatpush1.msra.mxu0 %v194
    %885 = vmatprep.subr.mxu0 %v197
    %886 = vmatpush1.msra.mxu0 %v196
    %887 = vmatprep.subr.mxu0 %v199
    %888 = vmatpush1.msra.mxu0 %v198
    %889 = vmatprep.subr.mxu0 %v201
    %890 = vmatpush1.msra.mxu0 %v200
    %891 = vmatprep.subr.mxu0 %v203
    %892 = vmatpush1.msra.mxu0 %v202
    %893 = vmatprep.subr.mxu0 %v205
    %894 = vmatpush1.msra.mxu0 %v204
    %895 = vmatprep.subr.mxu0 %v207
    %896 = vmatpush1.msra.mxu0 %v206
    %897 = vmatprep.subr.mxu0 %v209
    %898 = vmatpush1.msra.mxu0 %v208
    %899 = vmatprep.subr.mxu0 %v211
    %900 = vmatpush1.msra.mxu0 %v210
    %901 = vmatprep.subr.mxu0 %v213
    %902 = vmatpush1.msra.mxu0 %v212
    %903 = vmatprep.subr.mxu0 %v215
    %904 = vmatpush1.msra.mxu0 %v214
    %905 = vmatprep.subr.mxu0 %v217
    %906 = vmatpush1.msra.mxu0 %v216
    %907 = vmatprep.subr.mxu0 %v219
    %908 = vmatpush1.msra.mxu0 %v218
    %909 = vmatprep.subr.mxu0 %v221
    %910 = vmatpush1.msra.mxu0 %v220
    %911 = vmatprep.subr.mxu0 %v223
    %912 = vmatpush1.msra.mxu0 %v222
    %913 = vmatprep.subr.mxu0 %v225
    %914 = vmatpush1.msra.mxu0 %v224
    %915 = vmatprep.subr.mxu0 %v227
    %916 = vmatpush1.msra.mxu0 %v226
    %917 = vmatprep.mubr.f32.mxu0 %v852
    %918 = vmatmul.mubr.f32.gmra.mrb[0].mxu0 %v851
    %v919 = vpop.f32.mrb[0].mxu0
    %v920 = vadd.f32 0.0, %v919
    %v921 = vpop.f32.mrb[0].mxu0
    %v922 = vadd.f32 0.0, %v921
    %923 = vdwg.mxu0
    %v924 = vmul.f32 %v851, 0.95
    %v925 = vmul.f32 %v852, 0.95
    %v928 = vrot.slane %v920, 2
    %v929 = vrot.slane %v922, 2
    %v932 = vadd.f32 %v160, %v928
    %v933 = vadd.f32 %v162, %v929
    %v934 = vmax.f32 %v932, 0.0
    %v935 = vmax.f32 %v933, 0.0
    %v938 = vrot.slane %v934, 6
    %v939 = vrot.slane %v935, 6
    %v942 = vadd.f32 %v924, %v938
    %v943 = vadd.f32 %v925, %v939
    %v946 = vrot.slane %v408, 6
    %v947 = vrot.slane %v409, 6
    %v952 = vrot.slane %v499, 4
    %v953 = vrot.slane %v500, 4
    %v958 = vrot.slane %v590, 2
    %v959 = vrot.slane %v591, 2
    %v964 = vrot.slane %v760, 6
    %v965 = vrot.slane %v761, 6
    %v970 = vrot.slane %v851, 4
    %v971 = vrot.slane %v852, 4
    %v976 = vrot.slane %v942, 2
    %v977 = vrot.slane %v943, 2
    %vm980 = vcmask 1041408
    %v981 = vsel %vm980, %v317, %v946
    %v982 = vsel %vm980, %v318, %v947
    %v983 = vsel %vm82, %v981, %v952
    %v984 = vsel %vm82, %v982, %v953
    %vm985 = vcmask 1045504
    %v986 = vsel %vm985, %v983, %v958
    %v987 = vsel %vm985, %v984, %v959
    %v988 = vsel %vm980, %v669, %v964
    %v989 = vsel %vm980, %v670, %v965
    %v990 = vsel %vm82, %v988, %v970
    %v991 = vsel %vm82, %v989, %v971
    %v992 = vsel %vm985, %v990, %v976
    %v993 = vsel %vm985, %v991, %v977
    %994 = vst [vmem:[#allocation7] sm:$0xff] %v986
    %995 = vst [vmem:[#allocation7 + $0x8] sm:$0xff] %v987
    %996 = vst [vmem:[#allocation7 + $0x10] sm:$0xff] %v992
    %997 = vst [vmem:[#allocation7 + $0x18] sm:$0xff] %v993
    %v998 = vld [vmem:[#allocation5] sm:$0xff]
    %v999 = vld [vmem:[#allocation5 + $0x8] sm:$0xff]
    %v1000 = vld [vmem:[#allocation5 + $0x10] sm:$0xff]
    %v1001 = vld [vmem:[#allocation5 + $0x18] sm:$0xff]
    %v1002 = vld [vmem:[#allocation5 + $0x20] sm:$0xff]
    %v1003 = vld [vmem:[#allocation5 + $0x28] sm:$0xff]
    %v1004 = vld [vmem:[#allocation5 + $0x30] sm:$0xff]
    %v1005 = vld [vmem:[#allocation5 + $0x38] sm:$0xff]
    %v1006 = vld [vmem:[#allocation5 + $0x40] sm:$0xff]
    %v1007 = vld [vmem:[#allocation5 + $0x48] sm:$0xff]
    %v1008 = vld [vmem:[#allocation5 + $0x50] sm:$0xff]
    %v1009 = vld [vmem:[#allocation5 + $0x58] sm:$0xff]
    %v1010 = vld [vmem:[#allocation5 + $0x60] sm:$0xff]
    %v1011 = vld [vmem:[#allocation5 + $0x68] sm:$0xff]
    %v1012 = vld [vmem:[#allocation5 + $0x70] sm:$0xff]
    %v1013 = vld [vmem:[#allocation5 + $0x78] sm:$0xff]
    %v1014 = vld [vmem:[#allocation5 + $0x80] sm:$0xff]
    %v1015 = vld [vmem:[#allocation5 + $0x88] sm:$0xff]
    %v1016 = vld [vmem:[#allocation5 + $0x90] sm:$0xff]
    %v1017 = vld [vmem:[#allocation5 + $0x98] sm:$0xff]
    %v1018 = vld [vmem:[#allocation5 + $0xa0] sm:$0xff]
    %v1019 = vld [vmem:[#allocation5 + $0xa8] sm:$0xff]
    %v1020 = vld [vmem:[#allocation5 + $0xb0] sm:$0xff]
    %v1021 = vld [vmem:[#allocation5 + $0xb8] sm:$0xff]
    %v1022 = vld [vmem:[#allocation5 + $0xc0] sm:$0xff]
    %v1023 = vld [vmem:[#allocation5 + $0xc8] sm:$0xff]
    %v1024 = vld [vmem:[#allocation5 + $0xd0] sm:$0xff]
    %v1025 = vld [vmem:[#allocation5 + $0xd8] sm:$0xff]
    %v1026 = vld [vmem:[#allocation5 + $0xe0] sm:$0xff]
    %v1027 = vld [vmem:[#allocation5 + $0xe8] sm:$0xff]
    %v1028 = vld [vmem:[#allocation5 + $0xf0] sm:$0xff]
    %v1029 = vld [vmem:[#allocation5 + $0xf8] sm:$0xff]
    %v1030 = vld [vmem:[%s6] sm:$0x1]
    %v1032 = vlaneseq
    %v1033 = vshrl.u32 %v1032, 7
    %v1034 = vsub.s32 0, %v1033
    %v1035 = vrot.slane %v1030, %v1034
    %1037 = vmatprep.subr.mxu0 0.0
    %1038 = vmatpush1.msra.mxu0 %v998
    %1039 = vmatprep.subr.mxu0 0.0
    %1040 = vmatpush1.msra.mxu0 %v999
    %1041 = vmatprep.subr.mxu0 0.0
    %1042 = vmatpush1.msra.mxu0 %v1000
    %1043 = vmatprep.subr.mxu0 0.0
    %1044 = vmatpush1.msra.mxu0 %v1001
    %1045 = vmatprep.subr.mxu0 0.0
    %1046 = vmatpush1.msra.mxu0 %v1002
    %1047 = vmatprep.subr.mxu0 0.0
    %1048 = vmatpush1.msra.mxu0 %v1003
    %1049 = vmatprep.subr.mxu0 0.0
    %1050 = vmatpush1.msra.mxu0 %v1004
    %1051 = vmatprep.subr.mxu0 0.0
    %1052 = vmatpush1.msra.mxu0 %v1005
    %1053 = vmatprep.subr.mxu0 0.0
    %1054 = vmatpush1.msra.mxu0 %v1006
    %1055 = vmatprep.subr.mxu0 0.0
    %1056 = vmatpush1.msra.mxu0 %v1007
    %1057 = vmatprep.subr.mxu0 0.0
    %1058 = vmatpush1.msra.mxu0 %v1008
    %1059 = vmatprep.subr.mxu0 0.0
    %1060 = vmatpush1.msra.mxu0 %v1009
    %1061 = vmatprep.subr.mxu0 0.0
    %1062 = vmatpush1.msra.mxu0 %v1010
    %1063 = vmatprep.subr.mxu0 0.0
    %1064 = vmatpush1.msra.mxu0 %v1011
    %1065 = vmatprep.subr.mxu0 0.0
    %1066 = vmatpush1.msra.mxu0 %v1012
    %1067 = vmatprep.subr.mxu0 0.0
    %1068 = vmatpush1.msra.mxu0 %v1013
    %1069 = vmatprep.subr.mxu0 0.0
    %1070 = vmatpush1.msra.mxu0 %v1014
    %1071 = vmatprep.subr.mxu0 0.0
    %1072 = vmatpush1.msra.mxu0 %v1015
    %1073 = vmatprep.subr.mxu0 0.0
    %1074 = vmatpush1.msra.mxu0 %v1016
    %1075 = vmatprep.subr.mxu0 0.0
    %1076 = vmatpush1.msra.mxu0 %v1017
    %1077 = vmatprep.subr.mxu0 0.0
    %1078 = vmatpush1.msra.mxu0 %v1018
    %1079 = vmatprep.subr.mxu0 0.0
    %1080 = vmatpush1.msra.mxu0 %v1019
    %1081 = vmatprep.subr.mxu0 0.0
    %1082 = vmatpush1.msra.mxu0 %v1020
    %1083 = vmatprep.subr.mxu0 0.0
    %1084 = vmatpush1.msra.mxu0 %v1021
    %1085 = vmatprep.subr.mxu0 0.0
    %1086 = vmatpush1.msra.mxu0 %v1022
    %1087 = vmatprep.subr.mxu0 0.0
    %1088 = vmatpush1.msra.mxu0 %v1023
    %1089 = vmatprep.subr.mxu0 0.0
    %1090 = vmatpush1.msra.mxu0 %v1024
    %1091 = vmatprep.subr.mxu0 0.0
    %1092 = vmatpush1.msra.mxu0 %v1025
    %1093 = vmatprep.subr.mxu0 0.0
    %1094 = vmatpush1.msra.mxu0 %v1026
    %1095 = vmatprep.subr.mxu0 0.0
    %1096 = vmatpush1.msra.mxu0 %v1027
    %1097 = vmatprep.subr.mxu0 0.0
    %1098 = vmatpush1.msra.mxu0 %v1028
    %1099 = vmatprep.subr.mxu0 0.0
    %1100 = vmatpush1.msra.mxu0 %v1029
    %1101 = vmatprep.mubr.f32.mxu0 %v987
    %1102 = vmatmul.mubr.f32.gmra.mrb[0].mxu0 %v986
    %v1103 = vpop.f32.mrb[0].mxu0
    %v1104 = vadd.f32 %v1035, %v1103
    %v1105 = vpop.f32.mrb[0].mxu0
    %1106 = vmatprep.mubr.f32.mxu0 %v993
    %1107 = vmatmul.mubr.f32.gmra.mrb[0].mxu0 %v992
    %v1108 = vpop.f32.mrb[0].mxu0
    %v1109 = vadd.f32 %v1035, %v1108
    %v1110 = vpop.f32.mrb[0].mxu0
    %1111 = vdwg.mxu0
    %1112 = vst [vmem:[#allocation8] sm:$0xff] %v1104
    %1113 = vst [vmem:[#allocation8 + $0x8] sm:$0xff] %v1109
    // Predicated region
    $region38: #{tpu_custom_call.1} parent=1 // pred_check
      _
    $region39: #{tpu_custom_call.1} parent=1 // pred_check_branch
      %1115 = sbr.rel (0) target = $region41
    $region40: #{tpu_custom_call.1} parent=1 // pred_region
      %s1117 = ssub.s32 512, 512
      %1118 = vsyncadd [#allocation4], %s1117
      %s1119 = sshll.u32 [#allocation7], 4
      %s1120 = int_to_ptr.vmem [resolvable:$true] %s1119
      %1125 = dma.vmem_to_hbm [thread:$0]  %s1120, 512, %s7, [#allocation4], 256, 256, 16
    $region41: #{tpu_custom_call.1} parent=1 // pred_fallthru
      _
    // Predicated region
    $region42: #{tpu_custom_call.1} parent=1 // pred_check
      _
    $region43: #{tpu_custom_call.1} parent=1 // pred_check_branch
      %1127 = sbr.rel (0) target = $region45
    $region44: #{tpu_custom_call.1} parent=1 // pred_region
      %s1129 = ssub.s32 256, 256
      %1130 = vsyncadd [#allocation9], %s1129
      %s1131 = sshll.u32 [#allocation8], 4
      %s1132 = int_to_ptr.vmem [resolvable:$true] %s1131
      %1137 = dma.vmem_to_hbm [thread:$0]  %s1132, 256, %s8, [#allocation9], 128, 128, 8
    $region45: #{tpu_custom_call.1} parent=1 // pred_fallthru
      _
    // Predicated region
    $region46: #{tpu_custom_call.1} parent=1 // pred_check
      _
    $region47: #{tpu_custom_call.1} parent=1 // pred_check_branch
      %1139 = sbr.rel (0) target = $region49
    $region48: #{tpu_custom_call.1} parent=1 // pred_region
      %1140 = dma.done [#allocation4], 512
    $region49: #{tpu_custom_call.1} parent=1 // pred_fallthru
      _
    // Predicated region
    $region50: #{tpu_custom_call.1} parent=1 // pred_check
      _
    $region51: #{tpu_custom_call.1} parent=1 // pred_check_branch
      %1142 = sbr.rel (0) target = $region53
    $region52: #{tpu_custom_call.1} parent=1 // pred_region
      %1143 = dma.done [#allocation9], 256
    $region53: #{tpu_custom_call.1} parent=1 // pred_fallthru
      _
    %1144 = vsyncpa [#allocation3], 1
    %1145 = vsyncpa [#allocation6], 1
    %1146 = vsyncpa [#allocation4], 1
    %1147 = vsyncpa [#allocation9], 1

</llo_original>
